<compile_context>
chip_gen: v7x
topology: tpu7x:2x2x1
jax: 0.10.0
libtpu: 0.0.40
codegen_flags: <defaults>
</compile_context>

<pallas_src>
import functools

import jax
import jax.numpy as jnp
from jax.experimental import pallas as pl
from jax.experimental.pallas import tpu as pltpu

F_IN = 1024        # input features
H = 64             # hidden features
C = 36             # output classes
C_PAD = 128        # lane-dense padded output width
DEFAULT_TB = 2048  # batch tile (rows); ~18 MiB live VMEM at f32 x -> fits 32 MiB scoped
VMEM_LIMIT_BYTES = 32 * 1024 * 1024


def _round_up(n, m):
    return ((n + m - 1) // m) * m


def _fc_kernel(x_ref, w1_ref, b1_ref, w2_ref, b2_ref, out_ref):
    # x: (TB, 1024) f32/bf16, w1: (1024, 64) bf16, b1: (1, 64) f32,
    # w2: (64, 128) bf16 (zero-padded cols), b2: (1, 128) f32 (-1e30 in pad cols)

    # Cast to bf16 in VMEM (VPU) right before the MXU matmul — x travels over
    # HBM exactly once, in its native dtype.
    x = x_ref[...].astype(jnp.bfloat16)

    # fully_connect1 + sigmoid  (MXU bf16 matmul, f32 accumulate, EUP sigmoid)
    h = jnp.dot(x, w1_ref[...], preferred_element_type=jnp.float32) + b1_ref[...]
    s = jax.nn.sigmoid(h)

    # fully_connect_2 (padded to 128 output lanes; pad bias = -1e30)
    logits = jnp.dot(s.astype(jnp.bfloat16), w2_ref[...],
                     preferred_element_type=jnp.float32) + b2_ref[...]

    # log_softmax over the class axis; pad columns contribute exp(-1e30 - m) = 0
    m = jnp.max(logits, axis=1, keepdims=True)
    shifted = logits - m
    lse = jnp.log(jnp.sum(jnp.exp(shifted), axis=1, keepdims=True))
    out_ref[...] = (shifted - lse).astype(out_ref.dtype)


def prepare_fc_params(w1, b1, w2, b2):
    """One-time (model-init) weight prep: transpose, bf16 cast, lane padding.

    w1: (64, 1024), b1: (64,), w2: (36, 64), b2: (36,)  (PyTorch Linear layout).
    """
    assert w1.shape == (H, F_IN) and w2.shape == (C, H)
    w1_t = w1.T.astype(jnp.bfloat16)                              # (1024, 64)
    b1_r = b1.reshape(1, H).astype(jnp.float32)                   # (1, 64)
    # Zero weights + -1e30 bias keep padded logits out of max / logsumexp.
    w2_t = jnp.zeros((H, C_PAD), jnp.bfloat16).at[:, :C].set(w2.T.astype(jnp.bfloat16))
    b2_r = jnp.full((1, C_PAD), -1e30, jnp.float32).at[0, :C].set(b2.astype(jnp.float32))
    return w1_t, b1_r, w2_t, b2_r


def _pick_tile(B, tb):
    if tb is not None:
        return tb
    if B <= DEFAULT_TB:
        return _round_up(B, 8)
    # >1 grid step: keep the step count even so both v7x TensorCores get the
    # same number of tiles (each TC streams disjoint x tiles from HBM).
    n_tiles = pl.cdiv(B, DEFAULT_TB)
    if n_tiles % 2:
        n_tiles += 1
    return _round_up(pl.cdiv(B, n_tiles), 8)


def fully_connect_forward(x, params, *, tb=None, return_padded=False):
    """x: (B, 1024) f32 or bf16. params: output of prepare_fc_params."""
    w1_t, b1_r, w2_t, b2_r = params
    B, f_in = x.shape
    assert f_in == F_IN

    tb = _pick_tile(B, tb)
    grid = (pl.cdiv(B, tb),)

    x_bytes = jnp.dtype(x.dtype).itemsize
    cost = pl.CostEstimate(
        flops=2 * B * F_IN * H + 2 * B * H * C_PAD,
        transcendentals=B * (H + C_PAD),
        bytes_accessed=B * F_IN * x_bytes + F_IN * H * 2 + H * C_PAD * 2
        + (H + C_PAD) * 4 + B * C_PAD * 4,
    )

    out_padded = pl.pallas_call(
        _fc_kernel,
        out_shape=jax.ShapeDtypeStruct((B, C_PAD), jnp.float32),
        grid=grid,
        in_specs=[
            pl.BlockSpec((tb, F_IN), lambda i: (i, 0)),        # x: tiled over batch
            pl.BlockSpec((F_IN, H), lambda i: (0, 0)),         # w1: VMEM-resident
            pl.BlockSpec((1, H), lambda i: (0, 0)),            # b1
            pl.BlockSpec((H, C_PAD), lambda i: (0, 0)),        # w2 (padded)
            pl.BlockSpec((1, C_PAD), lambda i: (0, 0)),        # b2 (padded)
        ],
        out_specs=pl.BlockSpec((tb, C_PAD), lambda i: (i, 0)),
        compiler_params=pltpu.CompilerParams(
            dimension_semantics=("parallel",),        # batch axis shards across TCs
            vmem_limit_bytes=VMEM_LIMIT_BYTES,        # needed for tb=2048 on v5e
        ),
        cost_estimate=cost,
    )(x, w1_t, b1_r, w2_t, b2_r)

    if return_padded:
        # Padded columns hold garbage-free, fully valid log_softmax rows over
        # 36 real + 92 "-inf" classes; a fused consumer (e.g. NLL gather over
        # labels < 36) can use this directly and skip the slice pass.
        return out_padded
    return out_padded[:, :C]


def _init_linear(key, out_features, in_features):
    # Deterministic init mimicking PyTorch nn.Linear default: U(-k, k), k = 1/sqrt(in)
    k = 1.0 / jnp.sqrt(jnp.float32(in_features))
    kw, kb = jax.random.split(key)
    w = jax.random.uniform(kw, (out_features, in_features), jnp.float32, -k, k)
    b = jax.random.uniform(kb, (out_features,), jnp.float32, -k, k)
    return w, b


if __name__ == "__main__":
    key = jax.random.PRNGKey(0)
    k_x, k_l1, k_l2 = jax.random.split(key, 3)

    B = 16
    x = jax.random.normal(k_x, (B, F_IN), dtype=jnp.float32)
    w1, b1 = _init_linear(k_l1, H, F_IN)
    w2, b2 = _init_linear(k_l2, C, H)

    # One-time weight prep (model init), then the hot forward path.
    params = prepare_fc_params(w1, b1, w2, b2)
    fwd = jax.jit(functools.partial(fully_connect_forward))
    out = fwd(x, params)
    jax.block_until_ready(out)

    # Sanity check against pure-JAX f32 reference (loose tolerance: kernel
    # runs its matmuls with bf16 operands and f32 accumulation).
    h_ref = jax.nn.sigmoid(x @ w1.T + b1)
    logits_ref = h_ref @ w2.T + b2
    ref = jax.nn.log_softmax(logits_ref, axis=1)
    assert out.shape == (B, C)
    assert jnp.max(jnp.abs(out - ref)) < 5e-2
    # log_softmax rows must (approximately) exponentiate to 1.
    assert jnp.max(jnp.abs(jnp.sum(jnp.exp(out), axis=1) - 1.0)) < 1e-3

    print("KERNEL_OK")
</pallas_src>

<mosaic_0001>
module attributes {stable_mosaic.version = 11 : i64} {
  func.func @_fc_kernel(%arg0: i32, %arg1: memref<16x1024xf32, #tpu.memory_space<vmem>>, %arg2: memref<1024x64xbf16, #tpu.memory_space<vmem>>, %arg3: memref<1x64xf32, #tpu.memory_space<vmem>>, %arg4: memref<64x128xbf16, #tpu.memory_space<vmem>>, %arg5: memref<1x128xf32, #tpu.memory_space<vmem>>, %arg6: memref<16x128xf32, #tpu.memory_space<vmem>>) attributes {dimension_semantics = [#tpu.dimension_semantics<parallel>], iteration_bounds = array<i64: 1>, scalar_prefetch = 0 : i64, scratch_operands = 0 : i64, tpu.core_type = #tpu.core_type<tc>, window_params = [{transform_indices = @transform_0, window_bounds = array<i64: 16, 1024>}, {pipeline_mode = #tpu.pipeline_mode<synchronous>, transform_indices = @transform_1, window_bounds = array<i64: 1024, 64>}, {pipeline_mode = #tpu.pipeline_mode<synchronous>, transform_indices = @transform_2, window_bounds = array<i64: 1, 64>}, {pipeline_mode = #tpu.pipeline_mode<synchronous>, transform_indices = @transform_3, window_bounds = array<i64: 64, 128>}, {pipeline_mode = #tpu.pipeline_mode<synchronous>, transform_indices = @transform_4, window_bounds = array<i64: 1, 128>}, {transform_indices = @transform_5, window_bounds = array<i64: 16, 128>}]} {
    %c0 = arith.constant 0 : index
    %c0_0 = arith.constant 0 : index
    %0 = vector.load %arg1[%c0, %c0_0] : memref<16x1024xf32, #tpu.memory_space<vmem>>, vector<16x1024xf32>
    %1 = arith.truncf %0 : vector<16x1024xf32> to vector<16x1024xbf16>
    %c0_1 = arith.constant 0 : index
    %c0_2 = arith.constant 0 : index
    %2 = vector.load %arg2[%c0_1, %c0_2] : memref<1024x64xbf16, #tpu.memory_space<vmem>>, vector<1024x64xbf16>
    %cst = arith.constant dense<0.000000e+00> : vector<16x64xf32>
    %3 = tpu.matmul %1, %2, %cst {dimension_numbers = #tpu.dot_dimension_numbers<[1], [0], [0], [1], [0, 0, 1, 1], [], []>} : vector<16x1024xbf16>, vector<1024x64xbf16>, vector<16x64xf32> -> vector<16x64xf32>
    %c0_3 = arith.constant 0 : index
    %c0_4 = arith.constant 0 : index
    %4 = vector.load %arg3[%c0_3, %c0_4] : memref<1x64xf32, #tpu.memory_space<vmem>>, vector<1x64xf32>
    %5 = vector.broadcast %4 : vector<1x64xf32> to vector<16x64xf32>
    %6 = arith.addf %3, %5 : vector<16x64xf32>
    %7 = arith.negf %6 : vector<16x64xf32>
    %8 = math.exp %7 : vector<16x64xf32>
    %cst_5 = arith.constant 1.000000e+00 : f32
    %9 = vector.broadcast %cst_5 : f32 to vector<16x64xf32>
    %10 = arith.addf %9, %8 : vector<16x64xf32>
    %11 = arith.divf %9, %10 : vector<16x64xf32>
    %12 = arith.truncf %11 : vector<16x64xf32> to vector<16x64xbf16>
    %c0_6 = arith.constant 0 : index
    %c0_7 = arith.constant 0 : index
    %13 = vector.load %arg4[%c0_6, %c0_7] : memref<64x128xbf16, #tpu.memory_space<vmem>>, vector<64x128xbf16>
    %cst_8 = arith.constant dense<0.000000e+00> : vector<16x128xf32>
    %14 = tpu.matmul %12, %13, %cst_8 {dimension_numbers = #tpu.dot_dimension_numbers<[1], [0], [0], [1], [0, 0, 1, 1], [], []>} : vector<16x64xbf16>, vector<64x128xbf16>, vector<16x128xf32> -> vector<16x128xf32>
    %c0_9 = arith.constant 0 : index
    %c0_10 = arith.constant 0 : index
    %15 = vector.load %arg5[%c0_9, %c0_10] : memref<1x128xf32, #tpu.memory_space<vmem>>, vector<1x128xf32>
    %16 = vector.broadcast %15 : vector<1x128xf32> to vector<16x128xf32>
    %17 = arith.addf %14, %16 : vector<16x128xf32>
    %cst_11 = arith.constant dense<0xFF800000> : vector<16xf32>
    %18 = vector.multi_reduction <maximumf>, %17, %cst_11 [1] : vector<16x128xf32> to vector<16xf32>
    %19 = vector.shape_cast %18 : vector<16xf32> to vector<16x1xf32>
    %20 = vector.broadcast %19 : vector<16x1xf32> to vector<16x128xf32>
    %21 = arith.subf %17, %20 : vector<16x128xf32>
    %22 = math.exp %21 : vector<16x128xf32>
    %cst_12 = arith.constant dense<0.000000e+00> : vector<16xf32>
    %23 = vector.multi_reduction <add>, %22, %cst_12 [1] : vector<16x128xf32> to vector<16xf32>
    %24 = vector.shape_cast %23 : vector<16xf32> to vector<16x1xf32>
    %25 = math.log %24 : vector<16x1xf32>
    %26 = vector.broadcast %25 : vector<16x1xf32> to vector<16x128xf32>
    %27 = arith.subf %21, %26 : vector<16x128xf32>
    %c0_13 = arith.constant 0 : index
    %c0_14 = arith.constant 0 : index
    %28 = vector.load %arg6[%c0_13, %c0_14] : memref<16x128xf32, #tpu.memory_space<vmem>>, vector<16x128xf32>
    tpu.vector_store %arg6[%c0_13, %c0_14], %27 {strides = array<i32>} : memref<16x128xf32, #tpu.memory_space<vmem>>, vector<16x128xf32>,
    return
  }
  func.func @transform_0(%arg0: i32) -> (i32, i32) {
    %c0_i32 = arith.constant 0 : i32
    %c0_i32_0 = arith.constant 0 : i32
    return %arg0, %c0_i32 : i32, i32
  }
  func.func @transform_1(%arg0: i32) -> (i32, i32) {
    %c0_i32 = arith.constant 0 : i32
    %c0_i32_0 = arith.constant 0 : i32
    %c0_i32_1 = arith.constant 0 : i32
    return %c0_i32, %c0_i32_0 : i32, i32
  }
  func.func @transform_2(%arg0: i32) -> (i32, i32) {
    %c0_i32 = arith.constant 0 : i32
    %c0_i32_0 = arith.constant 0 : i32
    %c0_i32_1 = arith.constant 0 : i32
    return %c0_i32, %c0_i32_0 : i32, i32
  }
  func.func @transform_3(%arg0: i32) -> (i32, i32) {
    %c0_i32 = arith.constant 0 : i32
    %c0_i32_0 = arith.constant 0 : i32
    %c0_i32_1 = arith.constant 0 : i32
    return %c0_i32, %c0_i32_0 : i32, i32
  }
  func.func @transform_4(%arg0: i32) -> (i32, i32) {
    %c0_i32 = arith.constant 0 : i32
    %c0_i32_0 = arith.constant 0 : i32
    %c0_i32_1 = arith.constant 0 : i32
    return %c0_i32, %c0_i32_0 : i32, i32
  }
  func.func @transform_5(%arg0: i32) -> (i32, i32) {
    %c0_i32 = arith.constant 0 : i32
    %c0_i32_0 = arith.constant 0 : i32
    return %arg0, %c0_i32 : i32, i32
  }
}

</mosaic_0001>

<llo_original>
// kernel: fully_connect_forward.1
$region0: #{fully_connect_forward.1}
  #allocation0 [shape = 'u32[]', space=smem, size = 0x4, offset = 0x4, fixed_abs, tag = 'smem constant byte address 0x4 - core index']
  #allocation1 [shape = 'u32[144,128]{1,0:T(1,128)}', space=vmem, size = 0x12000, scoped, tag = 'internal scratch']
  %s0 = inlined_call_operand.vmem [shape: f32[16,1024], index: 0, kind: input, shape index: {}]
  %s1 = inlined_call_operand.vmem [shape: bf16[1024,64], index: 1, kind: input, shape index: {}]
  %s2 = inlined_call_operand.vmem [shape: f32[1,64], index: 2, kind: input, shape index: {}]
  %s3 = inlined_call_operand.vmem [shape: bf16[64,128], index: 3, kind: input, shape index: {}]
  %s4 = inlined_call_operand.vmem [shape: f32[1,128], index: 4, kind: input, shape index: {}]
  %s5 = inlined_call_operand.hbm [shape: f32[16,128], index: 5, kind: output, shape index: {}]
  %s6 = sld [smem:[#allocation0]]
  $region30: #{fully_connect_forward.1} parent=0
    _
  %s8 = ssub.s32 1, %s6
  %s9 = scalar_select 0, %s8, %s6
  $region1: #{fully_connect_forward.1} parent=0
    #allocation2 [shape = 'u8[8192]{0}', space=vmem, size = 0x2000, scoped, tag = 'output window, operand 0, single buffered']
    #allocation3 [shape = 's32[1]{0}', space=sflag, size = 0x4, scoped, tag = 'scoped memory for fully_connect_forward.1']
    %10 = vsyncpa [#allocation3], 0
    // Predicated region
    $region2: #{fully_connect_forward.1} parent=1 // pred_check
      _
    $region3: #{fully_connect_forward.1} parent=1 // pred_check_branch
      %12 = sbr.rel (0) target = $region5
    $region4: #{fully_connect_forward.1} parent=1 // pred_region
      _
    $region5: #{fully_connect_forward.1} parent=1 // pred_fallthru
      _
    // Predicated region
    $region6: #{fully_connect_forward.1} parent=1 // pred_check
      _
    $region7: #{fully_connect_forward.1} parent=1 // pred_check_branch
      %14 = sbr.rel (0) target = $region9
    $region8: #{fully_connect_forward.1} parent=1 // pred_region
      _
    $region9: #{fully_connect_forward.1} parent=1 // pred_fallthru
      _
    // Predicated region
    $region10: #{fully_connect_forward.1} parent=1 // pred_check
      _
    $region11: #{fully_connect_forward.1} parent=1 // pred_check_branch
      %16 = sbr.rel (0) target = $region13
    $region12: #{fully_connect_forward.1} parent=1 // pred_region
      _
    $region13: #{fully_connect_forward.1} parent=1 // pred_fallthru
      _
    // Predicated region
    $region14: #{fully_connect_forward.1} parent=1 // pred_check
      _
    $region15: #{fully_connect_forward.1} parent=1 // pred_check_branch
      %18 = sbr.rel (0) target = $region17
    $region16: #{fully_connect_forward.1} parent=1 // pred_region
      _
    $region17: #{fully_connect_forward.1} parent=1 // pred_fallthru
      _
    // Predicated region
    $region18: #{fully_connect_forward.1} parent=1 // pred_check
      _
    $region19: #{fully_connect_forward.1} parent=1 // pred_check_branch
      %20 = sbr.rel (0) target = $region21
    $region20: #{fully_connect_forward.1} parent=1 // pred_region
      _
    $region21: #{fully_connect_forward.1} parent=1 // pred_fallthru
      _
    %v22 = vld [vmem:[%s0] sm:$0xff]
    %v23 = vld [vmem:[%s0 + $0x8] sm:$0xff]
    %v24 = vld [vmem:[%s0 + $0x10] sm:$0xff]
    %v25 = vld [vmem:[%s0 + $0x18] sm:$0xff]
    %v26 = vld [vmem:[%s0 + $0x20] sm:$0xff]
    %v27 = vld [vmem:[%s0 + $0x28] sm:$0xff]
    %v28 = vld [vmem:[%s0 + $0x30] sm:$0xff]
    %v29 = vld [vmem:[%s0 + $0x38] sm:$0xff]
    %v30 = vld [vmem:[%s0 + $0x40] sm:$0xff]
    %v31 = vld [vmem:[%s0 + $0x48] sm:$0xff]
    %v32 = vld [vmem:[%s0 + $0x50] sm:$0xff]
    %v33 = vld [vmem:[%s0 + $0x58] sm:$0xff]
    %v34 = vld [vmem:[%s0 + $0x60] sm:$0xff]
    %v35 = vld [vmem:[%s0 + $0x68] sm:$0xff]
    %v36 = vld [vmem:[%s0 + $0x70] sm:$0xff]
    %v37 = vld [vmem:[%s0 + $0x78] sm:$0xff]
    %v38 = vpack.c.bf16 %v30, %v22
    %v39 = vpack.c.bf16 %v31, %v23
    %v40 = vpack.c.bf16 %v32, %v24
    %v41 = vpack.c.bf16 %v33, %v25
    %v42 = vpack.c.bf16 %v34, %v26
    %v43 = vpack.c.bf16 %v35, %v27
    %v44 = vpack.c.bf16 %v36, %v28
    %v45 = vpack.c.bf16 %v37, %v29
    %v46 = vld [vmem:[%s1] sm:$0xf]
    %v47 = vld [vmem:[%s1 + $0x4] sm:$0xf]
    %v48 = vld [vmem:[%s1 + $0x8] sm:$0xf]
    %v49 = vld [vmem:[%s1 + $0xc] sm:$0xf]
    %v50 = vld [vmem:[%s1 + $0x10] sm:$0xf]
    %v51 = vld [vmem:[%s1 + $0x14] sm:$0xf]
    %v52 = vld [vmem:[%s1 + $0x18] sm:$0xf]
    %v53 = vld [vmem:[%s1 + $0x1c] sm:$0xf]
    %v54 = vld [vmem:[%s1 + $0x20] sm:$0xf]
    %v55 = vld [vmem:[%s1 + $0x24] sm:$0xf]
    %v56 = vld [vmem:[%s1 + $0x28] sm:$0xf]
    %v57 = vld [vmem:[%s1 + $0x2c] sm:$0xf]
    %v58 = vld [vmem:[%s1 + $0x30] sm:$0xf]
    %v59 = vld [vmem:[%s1 + $0x34] sm:$0xf]
    %v60 = vld [vmem:[%s1 + $0x38] sm:$0xf]
    %v61 = vld [vmem:[%s1 + $0x3c] sm:$0xf]
    %v62 = vld [vmem:[%s1 + $0x40] sm:$0xf]
    %v63 = vld [vmem:[%s1 + $0x44] sm:$0xf]
    %v64 = vld [vmem:[%s1 + $0x48] sm:$0xf]
    %v65 = vld [vmem:[%s1 + $0x4c] sm:$0xf]
    %v66 = vld [vmem:[%s1 + $0x50] sm:$0xf]
    %v67 = vld [vmem:[%s1 + $0x54] sm:$0xf]
    %v68 = vld [vmem:[%s1 + $0x58] sm:$0xf]
    %v69 = vld [vmem:[%s1 + $0x5c] sm:$0xf]
    %v70 = vld [vmem:[%s1 + $0x60] sm:$0xf]
    %v71 = vld [vmem:[%s1 + $0x64] sm:$0xf]
    %v72 = vld [vmem:[%s1 + $0x68] sm:$0xf]
    %v73 = vld [vmem:[%s1 + $0x6c] sm:$0xf]
    %v74 = vld [vmem:[%s1 + $0x70] sm:$0xf]
    %v75 = vld [vmem:[%s1 + $0x74] sm:$0xf]
    %v76 = vld [vmem:[%s1 + $0x78] sm:$0xf]
    %v77 = vld [vmem:[%s1 + $0x7c] sm:$0xf]
    %v78 = vld [vmem:[%s1 + $0x80] sm:$0xf]
    %v79 = vld [vmem:[%s1 + $0x84] sm:$0xf]
    %v80 = vld [vmem:[%s1 + $0x88] sm:$0xf]
    %v81 = vld [vmem:[%s1 + $0x8c] sm:$0xf]
    %v82 = vld [vmem:[%s1 + $0x90] sm:$0xf]
    %v83 = vld [vmem:[%s1 + $0x94] sm:$0xf]
    %v84 = vld [vmem:[%s1 + $0x98] sm:$0xf]
    %v85 = vld [vmem:[%s1 + $0x9c] sm:$0xf]
    %v86 = vld [vmem:[%s1 + $0xa0] sm:$0xf]
    %v87 = vld [vmem:[%s1 + $0xa4] sm:$0xf]
    %v88 = vld [vmem:[%s1 + $0xa8] sm:$0xf]
    %v89 = vld [vmem:[%s1 + $0xac] sm:$0xf]
    %v90 = vld [vmem:[%s1 + $0xb0] sm:$0xf]
    %v91 = vld [vmem:[%s1 + $0xb4] sm:$0xf]
    %v92 = vld [vmem:[%s1 + $0xb8] sm:$0xf]
    %v93 = vld [vmem:[%s1 + $0xbc] sm:$0xf]
    %v94 = vld [vmem:[%s1 + $0xc0] sm:$0xf]
    %v95 = vld [vmem:[%s1 + $0xc4] sm:$0xf]
    %v96 = vld [vmem:[%s1 + $0xc8] sm:$0xf]
    %v97 = vld [vmem:[%s1 + $0xcc] sm:$0xf]
    %v98 = vld [vmem:[%s1 + $0xd0] sm:$0xf]
    %v99 = vld [vmem:[%s1 + $0xd4] sm:$0xf]
    %v100 = vld [vmem:[%s1 + $0xd8] sm:$0xf]
    %v101 = vld [vmem:[%s1 + $0xdc] sm:$0xf]
    %v102 = vld [vmem:[%s1 + $0xe0] sm:$0xf]
    %v103 = vld [vmem:[%s1 + $0xe4] sm:$0xf]
    %v104 = vld [vmem:[%s1 + $0xe8] sm:$0xf]
    %v105 = vld [vmem:[%s1 + $0xec] sm:$0xf]
    %v106 = vld [vmem:[%s1 + $0xf0] sm:$0xf]
    %v107 = vld [vmem:[%s1 + $0xf4] sm:$0xf]
    %v108 = vld [vmem:[%s1 + $0xf8] sm:$0xf]
    %v109 = vld [vmem:[%s1 + $0xfc] sm:$0xf]
    %v110 = vld [vmem:[%s1 + $0x100] sm:$0xf]
    %v111 = vld [vmem:[%s1 + $0x104] sm:$0xf]
    %v112 = vld [vmem:[%s1 + $0x108] sm:$0xf]
    %v113 = vld [vmem:[%s1 + $0x10c] sm:$0xf]
    %v114 = vld [vmem:[%s1 + $0x110] sm:$0xf]
    %v115 = vld [vmem:[%s1 + $0x114] sm:$0xf]
    %v116 = vld [vmem:[%s1 + $0x118] sm:$0xf]
    %v117 = vld [vmem:[%s1 + $0x11c] sm:$0xf]
    %v118 = vld [vmem:[%s1 + $0x120] sm:$0xf]
    %v119 = vld [vmem:[%s1 + $0x124] sm:$0xf]
    %v120 = vld [vmem:[%s1 + $0x128] sm:$0xf]
    %v121 = vld [vmem:[%s1 + $0x12c] sm:$0xf]
    %v122 = vld [vmem:[%s1 + $0x130] sm:$0xf]
    %v123 = vld [vmem:[%s1 + $0x134] sm:$0xf]
    %v124 = vld [vmem:[%s1 + $0x138] sm:$0xf]
    %v125 = vld [vmem:[%s1 + $0x13c] sm:$0xf]
    %v126 = vld [vmem:[%s1 + $0x140] sm:$0xf]
    %v127 = vld [vmem:[%s1 + $0x144] sm:$0xf]
    %v128 = vld [vmem:[%s1 + $0x148] sm:$0xf]
    %v129 = vld [vmem:[%s1 + $0x14c] sm:$0xf]
    %v130 = vld [vmem:[%s1 + $0x150] sm:$0xf]
    %v131 = vld [vmem:[%s1 + $0x154] sm:$0xf]
    %v132 = vld [vmem:[%s1 + $0x158] sm:$0xf]
    %v133 = vld [vmem:[%s1 + $0x15c] sm:$0xf]
    %v134 = vld [vmem:[%s1 + $0x160] sm:$0xf]
    %v135 = vld [vmem:[%s1 + $0x164] sm:$0xf]
    %v136 = vld [vmem:[%s1 + $0x168] sm:$0xf]
    %v137 = vld [vmem:[%s1 + $0x16c] sm:$0xf]
    %v138 = vld [vmem:[%s1 + $0x170] sm:$0xf]
    %v139 = vld [vmem:[%s1 + $0x174] sm:$0xf]
    %v140 = vld [vmem:[%s1 + $0x178] sm:$0xf]
    %v141 = vld [vmem:[%s1 + $0x17c] sm:$0xf]
    %v142 = vld [vmem:[%s1 + $0x180] sm:$0xf]
    %v143 = vld [vmem:[%s1 + $0x184] sm:$0xf]
    %v144 = vld [vmem:[%s1 + $0x188] sm:$0xf]
    %v145 = vld [vmem:[%s1 + $0x18c] sm:$0xf]
    %v146 = vld [vmem:[%s1 + $0x190] sm:$0xf]
    %v147 = vld [vmem:[%s1 + $0x194] sm:$0xf]
    %v148 = vld [vmem:[%s1 + $0x198] sm:$0xf]
    %v149 = vld [vmem:[%s1 + $0x19c] sm:$0xf]
    %v150 = vld [vmem:[%s1 + $0x1a0] sm:$0xf]
    %v151 = vld [vmem:[%s1 + $0x1a4] sm:$0xf]
    %v152 = vld [vmem:[%s1 + $0x1a8] sm:$0xf]
    %v153 = vld [vmem:[%s1 + $0x1ac] sm:$0xf]
    %v154 = vld [vmem:[%s1 + $0x1b0] sm:$0xf]
    %v155 = vld [vmem:[%s1 + $0x1b4] sm:$0xf]
    %v156 = vld [vmem:[%s1 + $0x1b8] sm:$0xf]
    %v157 = vld [vmem:[%s1 + $0x1bc] sm:$0xf]
    %v158 = vld [vmem:[%s1 + $0x1c0] sm:$0xf]
    %v159 = vld [vmem:[%s1 + $0x1c4] sm:$0xf]
    %v160 = vld [vmem:[%s1 + $0x1c8] sm:$0xf]
    %v161 = vld [vmem:[%s1 + $0x1cc] sm:$0xf]
    %v162 = vld [vmem:[%s1 + $0x1d0] sm:$0xf]
    %v163 = vld [vmem:[%s1 + $0x1d4] sm:$0xf]
    %v164 = vld [vmem:[%s1 + $0x1d8] sm:$0xf]
    %v165 = vld [vmem:[%s1 + $0x1dc] sm:$0xf]
    %v166 = vld [vmem:[%s1 + $0x1e0] sm:$0xf]
    %v167 = vld [vmem:[%s1 + $0x1e4] sm:$0xf]
    %v168 = vld [vmem:[%s1 + $0x1e8] sm:$0xf]
    %v169 = vld [vmem:[%s1 + $0x1ec] sm:$0xf]
    %v170 = vld [vmem:[%s1 + $0x1f0] sm:$0xf]
    %v171 = vld [vmem:[%s1 + $0x1f4] sm:$0xf]
    %v172 = vld [vmem:[%s1 + $0x1f8] sm:$0xf]
    %v173 = vld [vmem:[%s1 + $0x1fc] sm:$0xf]
    %v174 = vld [vmem:[%s2] sm:$0x1]
    %v176 = vlaneseq
    %v177 = vshrl.u32 %v176, 7
    %v178 = vsub.s32 0, %v177
    %v179 = vrot.slane %v174, %v178
    %v309 = vunpack.c.l.b16 %v46
    %v310 = vunpack.c.l.b16 %v47
    %v311 = vunpack.c.l.b16 %v48
    %v312 = vunpack.c.l.b16 %v49
    %v313 = vunpack.c.l.b16 %v50
    %v314 = vunpack.c.l.b16 %v51
    %v315 = vunpack.c.l.b16 %v52
    %v316 = vunpack.c.l.b16 %v53
    %v317 = vunpack.c.l.b16 %v54
    %v318 = vunpack.c.l.b16 %v55
    %v319 = vunpack.c.l.b16 %v56
    %v320 = vunpack.c.l.b16 %v57
    %v321 = vunpack.c.l.b16 %v58
    %v322 = vunpack.c.l.b16 %v59
    %v323 = vunpack.c.l.b16 %v60
    %v324 = vunpack.c.l.b16 %v61
    %v325 = vunpack.c.l.b16 %v62
    %v326 = vunpack.c.l.b16 %v63
    %v327 = vunpack.c.l.b16 %v64
    %v328 = vunpack.c.l.b16 %v65
    %v329 = vunpack.c.l.b16 %v66
    %v330 = vunpack.c.l.b16 %v67
    %v331 = vunpack.c.l.b16 %v68
    %v332 = vunpack.c.l.b16 %v69
    %v333 = vunpack.c.l.b16 %v70
    %v334 = vunpack.c.l.b16 %v71
    %v335 = vunpack.c.l.b16 %v72
    %v336 = vunpack.c.l.b16 %v73
    %v337 = vunpack.c.l.b16 %v74
    %v338 = vunpack.c.l.b16 %v75
    %v339 = vunpack.c.l.b16 %v76
    %v340 = vunpack.c.l.b16 %v77
    %v341 = vunpack.c.l.b16 %v78
    %v342 = vunpack.c.l.b16 %v79
    %v343 = vunpack.c.l.b16 %v80
    %v344 = vunpack.c.l.b16 %v81
    %v345 = vunpack.c.l.b16 %v82
    %v346 = vunpack.c.l.b16 %v83
    %v347 = vunpack.c.l.b16 %v84
    %v348 = vunpack.c.l.b16 %v85
    %v349 = vunpack.c.l.b16 %v86
    %v350 = vunpack.c.l.b16 %v87
    %v351 = vunpack.c.l.b16 %v88
    %v352 = vunpack.c.l.b16 %v89
    %v353 = vunpack.c.l.b16 %v90
    %v354 = vunpack.c.l.b16 %v91
    %v355 = vunpack.c.l.b16 %v92
    %v356 = vunpack.c.l.b16 %v93
    %v357 = vunpack.c.l.b16 %v94
    %v358 = vunpack.c.l.b16 %v95
    %v359 = vunpack.c.l.b16 %v96
    %v360 = vunpack.c.l.b16 %v97
    %v361 = vunpack.c.l.b16 %v98
    %v362 = vunpack.c.l.b16 %v99
    %v363 = vunpack.c.l.b16 %v100
    %v364 = vunpack.c.l.b16 %v101
    %v365 = vunpack.c.l.b16 %v102
    %v366 = vunpack.c.l.b16 %v103
    %v367 = vunpack.c.l.b16 %v104
    %v368 = vunpack.c.l.b16 %v105
    %v369 = vunpack.c.l.b16 %v106
    %v370 = vunpack.c.l.b16 %v107
    %v371 = vunpack.c.l.b16 %v108
    %v372 = vunpack.c.l.b16 %v109
    %v373 = vunpack.c.l.b16 %v110
    %v374 = vunpack.c.l.b16 %v111
    %v375 = vunpack.c.l.b16 %v112
    %v376 = vunpack.c.l.b16 %v113
    %v377 = vunpack.c.l.b16 %v114
    %v378 = vunpack.c.l.b16 %v115
    %v379 = vunpack.c.l.b16 %v116
    %v380 = vunpack.c.l.b16 %v117
    %v381 = vunpack.c.l.b16 %v118
    %v382 = vunpack.c.l.b16 %v119
    %v383 = vunpack.c.l.b16 %v120
    %v384 = vunpack.c.l.b16 %v121
    %v385 = vunpack.c.l.b16 %v122
    %v386 = vunpack.c.l.b16 %v123
    %v387 = vunpack.c.l.b16 %v124
    %v388 = vunpack.c.l.b16 %v125
    %v389 = vunpack.c.l.b16 %v126
    %v390 = vunpack.c.l.b16 %v127
    %v391 = vunpack.c.l.b16 %v128
    %v392 = vunpack.c.l.b16 %v129
    %v393 = vunpack.c.l.b16 %v130
    %v394 = vunpack.c.l.b16 %v131
    %v395 = vunpack.c.l.b16 %v132
    %v396 = vunpack.c.l.b16 %v133
    %v397 = vunpack.c.l.b16 %v134
    %v398 = vunpack.c.l.b16 %v135
    %v399 = vunpack.c.l.b16 %v136
    %v400 = vunpack.c.l.b16 %v137
    %v401 = vunpack.c.l.b16 %v138
    %v402 = vunpack.c.l.b16 %v139
    %v403 = vunpack.c.l.b16 %v140
    %v404 = vunpack.c.l.b16 %v141
    %v405 = vunpack.c.l.b16 %v142
    %v406 = vunpack.c.l.b16 %v143
    %v407 = vunpack.c.l.b16 %v144
    %v408 = vunpack.c.l.b16 %v145
    %v409 = vunpack.c.l.b16 %v146
    %v410 = vunpack.c.l.b16 %v147
    %v411 = vunpack.c.l.b16 %v148
    %v412 = vunpack.c.l.b16 %v149
    %v413 = vunpack.c.l.b16 %v150
    %v414 = vunpack.c.l.b16 %v151
    %v415 = vunpack.c.l.b16 %v152
    %v416 = vunpack.c.l.b16 %v153
    %v417 = vunpack.c.l.b16 %v154
    %v418 = vunpack.c.l.b16 %v155
    %v419 = vunpack.c.l.b16 %v156
    %v420 = vunpack.c.l.b16 %v157
    %v421 = vunpack.c.l.b16 %v158
    %v422 = vunpack.c.l.b16 %v159
    %v423 = vunpack.c.l.b16 %v160
    %v424 = vunpack.c.l.b16 %v161
    %v425 = vunpack.c.l.b16 %v162
    %v426 = vunpack.c.l.b16 %v163
    %v427 = vunpack.c.l.b16 %v164
    %v428 = vunpack.c.l.b16 %v165
    %v429 = vunpack.c.l.b16 %v166
    %v430 = vunpack.c.l.b16 %v167
    %v431 = vunpack.c.l.b16 %v168
    %v432 = vunpack.c.l.b16 %v169
    %v433 = vunpack.c.l.b16 %v170
    %v434 = vunpack.c.l.b16 %v171
    %v435 = vunpack.c.l.b16 %v172
    %v436 = vunpack.c.l.b16 %v173
    %v437 = vpack.c.b16 %v310, %v309
    %v438 = vpack.c.b16 %v312, %v311
    %v439 = vpack.c.b16 %v314, %v313
    %v440 = vpack.c.b16 %v316, %v315
    %v441 = vpack.c.b16 %v318, %v317
    %v442 = vpack.c.b16 %v320, %v319
    %v443 = vpack.c.b16 %v322, %v321
    %v444 = vpack.c.b16 %v324, %v323
    %v445 = vpack.c.b16 %v326, %v325
    %v446 = vpack.c.b16 %v328, %v327
    %v447 = vpack.c.b16 %v330, %v329
    %v448 = vpack.c.b16 %v332, %v331
    %v449 = vpack.c.b16 %v334, %v333
    %v450 = vpack.c.b16 %v336, %v335
    %v451 = vpack.c.b16 %v338, %v337
    %v452 = vpack.c.b16 %v340, %v339
    %v453 = vpack.c.b16 %v342, %v341
    %v454 = vpack.c.b16 %v344, %v343
    %v455 = vpack.c.b16 %v346, %v345
    %v456 = vpack.c.b16 %v348, %v347
    %v457 = vpack.c.b16 %v350, %v349
    %v458 = vpack.c.b16 %v352, %v351
    %v459 = vpack.c.b16 %v354, %v353
    %v460 = vpack.c.b16 %v356, %v355
    %v461 = vpack.c.b16 %v358, %v357
    %v462 = vpack.c.b16 %v360, %v359
    %v463 = vpack.c.b16 %v362, %v361
    %v464 = vpack.c.b16 %v364, %v363
    %v465 = vpack.c.b16 %v366, %v365
    %v466 = vpack.c.b16 %v368, %v367
    %v467 = vpack.c.b16 %v370, %v369
    %v468 = vpack.c.b16 %v372, %v371
    %v469 = vpack.c.b16 %v374, %v373
    %v470 = vpack.c.b16 %v376, %v375
    %v471 = vpack.c.b16 %v378, %v377
    %v472 = vpack.c.b16 %v380, %v379
    %v473 = vpack.c.b16 %v382, %v381
    %v474 = vpack.c.b16 %v384, %v383
    %v475 = vpack.c.b16 %v386, %v385
    %v476 = vpack.c.b16 %v388, %v387
    %v477 = vpack.c.b16 %v390, %v389
    %v478 = vpack.c.b16 %v392, %v391
    %v479 = vpack.c.b16 %v394, %v393
    %v480 = vpack.c.b16 %v396, %v395
    %v481 = vpack.c.b16 %v398, %v397
    %v482 = vpack.c.b16 %v400, %v399
    %v483 = vpack.c.b16 %v402, %v401
    %v484 = vpack.c.b16 %v404, %v403
    %v485 = vpack.c.b16 %v406, %v405
    %v486 = vpack.c.b16 %v408, %v407
    %v487 = vpack.c.b16 %v410, %v409
    %v488 = vpack.c.b16 %v412, %v411
    %v489 = vpack.c.b16 %v414, %v413
    %v490 = vpack.c.b16 %v416, %v415
    %v491 = vpack.c.b16 %v418, %v417
    %v492 = vpack.c.b16 %v420, %v419
    %v493 = vpack.c.b16 %v422, %v421
    %v494 = vpack.c.b16 %v424, %v423
    %v495 = vpack.c.b16 %v426, %v425
    %v496 = vpack.c.b16 %v428, %v427
    %v497 = vpack.c.b16 %v430, %v429
    %v498 = vpack.c.b16 %v432, %v431
    %v499 = vpack.c.b16 %v434, %v433
    %v500 = vpack.c.b16 %v436, %v435
    %565 = vmatprep.subr.bf16.mxu0 0
    %566 = vmatpush1.bf16.msra.mxu0 %v437
    %567 = vmatprep.subr.bf16.mxu0 0
    %568 = vmatpush1.bf16.msra.mxu0 %v438
    %569 = vmatprep.subr.bf16.mxu0 0
    %570 = vmatpush1.bf16.msra.mxu0 %v439
    %571 = vmatprep.subr.bf16.mxu0 0
    %572 = vmatpush1.bf16.msra.mxu0 %v440
    %573 = vmatprep.subr.bf16.mxu0 0
    %574 = vmatpush1.bf16.msra.mxu0 %v441
    %575 = vmatprep.subr.bf16.mxu0 0
    %576 = vmatpush1.bf16.msra.mxu0 %v442
    %577 = vmatprep.subr.bf16.mxu0 0
    %578 = vmatpush1.bf16.msra.mxu0 %v443
    %579 = vmatprep.subr.bf16.mxu0 0
    %580 = vmatpush1.bf16.msra.mxu0 %v444
    %581 = vmatprep.subr.bf16.mxu0 0
    %582 = vmatpush1.bf16.msra.mxu0 %v445
    %583 = vmatprep.subr.bf16.mxu0 0
    %584 = vmatpush1.bf16.msra.mxu0 %v446
    %585 = vmatprep.subr.bf16.mxu0 0
    %586 = vmatpush1.bf16.msra.mxu0 %v447
    %587 = vmatprep.subr.bf16.mxu0 0
    %588 = vmatpush1.bf16.msra.mxu0 %v448
    %589 = vmatprep.subr.bf16.mxu0 0
    %590 = vmatpush1.bf16.msra.mxu0 %v449
    %591 = vmatprep.subr.bf16.mxu0 0
    %592 = vmatpush1.bf16.msra.mxu0 %v450
    %593 = vmatprep.subr.bf16.mxu0 0
    %594 = vmatpush1.bf16.msra.mxu0 %v451
    %595 = vmatprep.subr.bf16.mxu0 0
    %596 = vmatpush1.bf16.msra.mxu0 %v452
    %597 = vmatprep.mubr.bf16.mxu0 %v39
    %598 = vmatmul.mubr.bf16.gmra.mrb[0].mxu0 %v38
    %v599 = vpop.f32.mrb[0].mxu0
    %v600 = vadd.f32 %v179, %v599
    %v601 = vpop.f32.mrb[0].mxu0
    %v602 = vpop.f32.mrb[0].mxu0
    %v603 = vadd.f32 %v179, %v602
    %v604 = vpop.f32.mrb[0].mxu0
    %605 = vdwg.mxu0
    %606 = vmatprep.subr.bf16.mxu0 0
    %607 = vmatpush1.bf16.msra.mxu0 %v453
    %608 = vmatprep.subr.bf16.mxu0 0
    %609 = vmatpush1.bf16.msra.mxu0 %v454
    %610 = vmatprep.subr.bf16.mxu0 0
    %611 = vmatpush1.bf16.msra.mxu0 %v455
    %612 = vmatprep.subr.bf16.mxu0 0
    %613 = vmatpush1.bf16.msra.mxu0 %v456
    %614 = vmatprep.subr.bf16.mxu0 0
    %615 = vmatpush1.bf16.msra.mxu0 %v457
    %616 = vmatprep.subr.bf16.mxu0 0
    %617 = vmatpush1.bf16.msra.mxu0 %v458
    %618 = vmatprep.subr.bf16.mxu0 0
    %619 = vmatpush1.bf16.msra.mxu0 %v459
    %620 = vmatprep.subr.bf16.mxu0 0
    %621 = vmatpush1.bf16.msra.mxu0 %v460
    %622 = vmatprep.subr.bf16.mxu0 0
    %623 = vmatpush1.bf16.msra.mxu0 %v461
    %624 = vmatprep.subr.bf16.mxu0 0
    %625 = vmatpush1.bf16.msra.mxu0 %v462
    %626 = vmatprep.subr.bf16.mxu0 0
    %627 = vmatpush1.bf16.msra.mxu0 %v463
    %628 = vmatprep.subr.bf16.mxu0 0
    %629 = vmatpush1.bf16.msra.mxu0 %v464
    %630 = vmatprep.subr.bf16.mxu0 0
    %631 = vmatpush1.bf16.msra.mxu0 %v465
    %632 = vmatprep.subr.bf16.mxu0 0
    %633 = vmatpush1.bf16.msra.mxu0 %v466
    %634 = vmatprep.subr.bf16.mxu0 0
    %635 = vmatpush1.bf16.msra.mxu0 %v467
    %636 = vmatprep.subr.bf16.mxu0 0
    %637 = vmatpush1.bf16.msra.mxu0 %v468
    %638 = vmatprep.mubr.bf16.mxu0 %v41
    %639 = vmatmul.mubr.bf16.gmra.mrb[0].mxu0 %v40
    %v640 = vpop.f32.mrb[0].mxu0
    %v641 = vadd.f32 %v600, %v640
    %v642 = vpop.f32.mrb[0].mxu0
    %v643 = vpop.f32.mrb[0].mxu0
    %v644 = vadd.f32 %v603, %v643
    %v645 = vpop.f32.mrb[0].mxu0
    %646 = vdwg.mxu0
    %647 = vmatprep.subr.bf16.mxu0 0
    %648 = vmatpush1.bf16.msra.mxu0 %v469
    %649 = vmatprep.subr.bf16.mxu0 0
    %650 = vmatpush1.bf16.msra.mxu0 %v470
    %651 = vmatprep.subr.bf16.mxu0 0
    %652 = vmatpush1.bf16.msra.mxu0 %v471
    %653 = vmatprep.subr.bf16.mxu0 0
    %654 = vmatpush1.bf16.msra.mxu0 %v472
    %655 = vmatprep.subr.bf16.mxu0 0
    %656 = vmatpush1.bf16.msra.mxu0 %v473
    %657 = vmatprep.subr.bf16.mxu0 0
    %658 = vmatpush1.bf16.msra.mxu0 %v474
    %659 = vmatprep.subr.bf16.mxu0 0
    %660 = vmatpush1.bf16.msra.mxu0 %v475
    %661 = vmatprep.subr.bf16.mxu0 0
    %662 = vmatpush1.bf16.msra.mxu0 %v476
    %663 = vmatprep.subr.bf16.mxu0 0
    %664 = vmatpush1.bf16.msra.mxu0 %v477
    %665 = vmatprep.subr.bf16.mxu0 0
    %666 = vmatpush1.bf16.msra.mxu0 %v478
    %667 = vmatprep.subr.bf16.mxu0 0
    %668 = vmatpush1.bf16.msra.mxu0 %v479
    %669 = vmatprep.subr.bf16.mxu0 0
    %670 = vmatpush1.bf16.msra.mxu0 %v480
    %671 = vmatprep.subr.bf16.mxu0 0
    %672 = vmatpush1.bf16.msra.mxu0 %v481
    %673 = vmatprep.subr.bf16.mxu0 0
    %674 = vmatpush1.bf16.msra.mxu0 %v482
    %675 = vmatprep.subr.bf16.mxu0 0
    %676 = vmatpush1.bf16.msra.mxu0 %v483
    %677 = vmatprep.subr.bf16.mxu0 0
    %678 = vmatpush1.bf16.msra.mxu0 %v484
    %679 = vmatprep.mubr.bf16.mxu0 %v43
    %680 = vmatmul.mubr.bf16.gmra.mrb[0].mxu0 %v42
    %v681 = vpop.f32.mrb[0].mxu0
    %v682 = vadd.f32 %v641, %v681
    %v683 = vpop.f32.mrb[0].mxu0
    %v684 = vpop.f32.mrb[0].mxu0
    %v685 = vadd.f32 %v644, %v684
    %v686 = vpop.f32.mrb[0].mxu0
    %687 = vdwg.mxu0
    %688 = vmatprep.subr.bf16.mxu0 0
    %689 = vmatpush1.bf16.msra.mxu0 %v485
    %690 = vmatprep.subr.bf16.mxu0 0
    %691 = vmatpush1.bf16.msra.mxu0 %v486
    %692 = vmatprep.subr.bf16.mxu0 0
    %693 = vmatpush1.bf16.msra.mxu0 %v487
    %694 = vmatprep.subr.bf16.mxu0 0
    %695 = vmatpush1.bf16.msra.mxu0 %v488
    %696 = vmatprep.subr.bf16.mxu0 0
    %697 = vmatpush1.bf16.msra.mxu0 %v489
    %698 = vmatprep.subr.bf16.mxu0 0
    %699 = vmatpush1.bf16.msra.mxu0 %v490
    %700 = vmatprep.subr.bf16.mxu0 0
    %701 = vmatpush1.bf16.msra.mxu0 %v491
    %702 = vmatprep.subr.bf16.mxu0 0
    %703 = vmatpush1.bf16.msra.mxu0 %v492
    %704 = vmatprep.subr.bf16.mxu0 0
    %705 = vmatpush1.bf16.msra.mxu0 %v493
    %706 = vmatprep.subr.bf16.mxu0 0
    %707 = vmatpush1.bf16.msra.mxu0 %v494
    %708 = vmatprep.subr.bf16.mxu0 0
    %709 = vmatpush1.bf16.msra.mxu0 %v495
    %710 = vmatprep.subr.bf16.mxu0 0
    %711 = vmatpush1.bf16.msra.mxu0 %v496
    %712 = vmatprep.subr.bf16.mxu0 0
    %713 = vmatpush1.bf16.msra.mxu0 %v497
    %714 = vmatprep.subr.bf16.mxu0 0
    %715 = vmatpush1.bf16.msra.mxu0 %v498
    %716 = vmatprep.subr.bf16.mxu0 0
    %717 = vmatpush1.bf16.msra.mxu0 %v499
    %718 = vmatprep.subr.bf16.mxu0 0
    %719 = vmatpush1.bf16.msra.mxu0 %v500
    %720 = vmatprep.mubr.bf16.mxu0 %v45
    %721 = vmatmul.mubr.bf16.gmra.mrb[0].mxu0 %v44
    %v722 = vpop.f32.mrb[0].mxu0
    %v723 = vadd.f32 %v682, %v722
    %v724 = vpop.f32.mrb[0].mxu0
    %v725 = vpop.f32.mrb[0].mxu0
    %v726 = vadd.f32 %v685, %v725
    %v727 = vpop.f32.mrb[0].mxu0
    %728 = vdwg.mxu0
    %v729 = vxor.u32 %v723, 2147483648
    %v730 = vxor.u32 %v726, 2147483648
    %v731 = vmul.f32 %v729, 1.442695
    %v732 = vpow.pop %v731
    %v733 = vmul.f32 %v730, 1.442695
    %v734 = vpow.pop %v733
    %v735 = vadd.f32 %v732, 1.0
    %v736 = vadd.f32 %v734, 1.0
    %v737 = vrcp.pop %v735
    %v738 = vmul.f32 1.0, %v737
    %v739 = vrcp.pop %v736
    %v740 = vmul.f32 1.0, %v739
    %v741 = vpack.c.bf16 %v740, %v738
    %v742 = vld [vmem:[%s3] sm:$0xf]
    %v743 = vld [vmem:[%s3 + $0x4] sm:$0xf]
    %v744 = vld [vmem:[%s3 + $0x8] sm:$0xf]
    %v745 = vld [vmem:[%s3 + $0xc] sm:$0xf]
    %v746 = vld [vmem:[%s3 + $0x10] sm:$0xf]
    %v747 = vld [vmem:[%s3 + $0x14] sm:$0xf]
    %v748 = vld [vmem:[%s3 + $0x18] sm:$0xf]
    %v749 = vld [vmem:[%s3 + $0x1c] sm:$0xf]
    %v750 = vld [vmem:[%s4] sm:$0x1]
    %v752 = vlaneseq
    %v753 = vshrl.u32 %v752, 7
    %v754 = vsub.s32 0, %v753
    %v755 = vrot.slane %v750, %v754
    %v765 = vunpack.c.l.b16 %v742
    %v766 = vunpack.c.l.b16 %v743
    %v767 = vunpack.c.l.b16 %v744
    %v768 = vunpack.c.l.b16 %v745
    %v769 = vunpack.c.l.b16 %v746
    %v770 = vunpack.c.l.b16 %v747
    %v771 = vunpack.c.l.b16 %v748
    %v772 = vunpack.c.l.b16 %v749
    %v773 = vpack.c.b16 %v766, %v765
    %v774 = vpack.c.b16 %v768, %v767
    %v775 = vpack.c.b16 %v770, %v769
    %v776 = vpack.c.b16 %v772, %v771
    %vm781 = vcmask 523264
    %v783 = vsel %vm781, %v741, 0
    %785 = vmatprep.subr.bf16.mxu0 0
    %786 = vmatpush1.bf16.msra.mxu0 %v773
    %787 = vmatprep.subr.bf16.mxu0 0
    %788 = vmatpush1.bf16.msra.mxu0 %v774
    %789 = vmatprep.subr.bf16.mxu0 0
    %790 = vmatpush1.bf16.msra.mxu0 %v775
    %791 = vmatprep.subr.bf16.mxu0 0
    %792 = vmatpush1.bf16.msra.mxu0 %v776
    %793 = vmatprep.subr.bf16.mxu0 0
    %794 = vmatpush1.bf16.msra.mxu0 0
    %795 = vmatprep.subr.bf16.mxu0 0
    %796 = vmatpush1.bf16.msra.mxu0 0
    %797 = vmatprep.subr.bf16.mxu0 0
    %798 = vmatpush1.bf16.msra.mxu0 0
    %799 = vmatprep.subr.bf16.mxu0 0
    %800 = vmatpush1.bf16.msra.mxu0 0
    %801 = vmatprep.subr.bf16.mxu0 0
    %802 = vmatpush1.bf16.msra.mxu0 0
    %803 = vmatprep.subr.bf16.mxu0 0
    %804 = vmatpush1.bf16.msra.mxu0 0
    %805 = vmatprep.subr.bf16.mxu0 0
    %806 = vmatpush1.bf16.msra.mxu0 0
    %807 = vmatprep.subr.bf16.mxu0 0
    %808 = vmatpush1.bf16.msra.mxu0 0
    %809 = vmatprep.subr.bf16.mxu0 0
    %810 = vmatpush1.bf16.msra.mxu0 0
    %811 = vmatprep.subr.bf16.mxu0 0
    %812 = vmatpush1.bf16.msra.mxu0 0
    %813 = vmatprep.subr.bf16.mxu0 0
    %814 = vmatpush1.bf16.msra.mxu0 0
    %815 = vmatprep.subr.bf16.mxu0 0
    %816 = vmatpush1.bf16.msra.mxu0 0
    %817 = vmatprep.mubr.bf16.mxu0 0
    %818 = vmatmul.mubr.bf16.gmra.mrb[0].mxu0 %v783
    %v819 = vpop.f32.mrb[0].mxu0
    %v820 = vadd.f32 %v755, %v819
    %v821 = vpop.f32.mrb[0].mxu0
    %v822 = vpop.f32.mrb[0].mxu0
    %v823 = vadd.f32 %v755, %v822
    %v824 = vpop.f32.mrb[0].mxu0
    %825 = vdwg.mxu0
    %826 = vmax.xlane.f32.xlu0 %v820
    %v827 = vpop.xlane.xlu0 %826
    %828 = vmax.xlane.f32.xlu0 %v823
    %v829 = vpop.xlane.xlu0 %828
    %v830 = vsub.f32 %v820, %v827
    %v831 = vsub.f32 %v823, %v829
    %v832 = vmul.f32 %v830, 1.442695
    %v833 = vpow.pop %v832
    %v834 = vmul.f32 %v831, 1.442695
    %v835 = vpow.pop %v834
    %836 = vadd.xlane.f32.xlu0 %v833
    %v837 = vpop.xlane.xlu0 %836
    %838 = vadd.xlane.f32.xlu0 %v835
    %v839 = vpop.xlane.xlu0 %838
    %v840 = vlog2.pop %v837
    %v841 = vmul.f32 %v840, 0.6931472
    %v842 = vlog2.pop %v839
    %v843 = vmul.f32 %v842, 0.6931472
    %v844 = vsub.f32 %v830, %v841
    %v845 = vsub.f32 %v831, %v843
    %846 = vst [vmem:[#allocation2] sm:$0xff] %v844
    %847 = vst [vmem:[#allocation2 + $0x8] sm:$0xff] %v845
    // Predicated region
    $region22: #{fully_connect_forward.1} parent=1 // pred_check
      _
    $region23: #{fully_connect_forward.1} parent=1 // pred_check_branch
      %849 = sbr.rel (0) target = $region25
    $region24: #{fully_connect_forward.1} parent=1 // pred_region
      %s851 = ssub.s32 256, 256
      %852 = vsyncadd [#allocation3], %s851
      %s853 = sshll.u32 [#allocation2], 4
      %s854 = int_to_ptr.vmem [resolvable:$true] %s853
      %859 = dma.vmem_to_hbm [thread:$0]  %s854, 256, %s5, [#allocation3], 128, 128, 8
    $region25: #{fully_connect_forward.1} parent=1 // pred_fallthru
      _
    // Predicated region
    $region26: #{fully_connect_forward.1} parent=1 // pred_check
      _
    $region27: #{fully_connect_forward.1} parent=1 // pred_check_branch
      %861 = sbr.rel (0) target = $region29
    $region28: #{fully_connect_forward.1} parent=1 // pred_region
      %862 = dma.done [#allocation3], 256
    $region29: #{fully_connect_forward.1} parent=1 // pred_fallthru
      _
    %863 = vsyncpa [#allocation3], 1

</llo_original>
